<compile_context>
chip_gen: v6e
topology: v6e:2x2x1
jax: 0.10.0
libtpu: 0.0.40
codegen_flags: <defaults>
</compile_context>

<pallas_src>
import jax
import jax.numpy as jnp
from jax.experimental import pallas as pl
from jax.experimental.pallas import tpu as pltpu


def _add_self_kernel(a_ref, o_ref):
    # out = a + a, one VPU elementwise pass over the single VMEM tile.
    a = a_ref[...]
    o_ref[...] = a + a


def quant_add(a: jax.Array) -> jax.Array:
    """Computes a + a with a single, grid-free, lane-dense Pallas kernel.

    The (13, 3) array is flattened to (1, 39) so it occupies one vreg row
    (lane-dense) instead of 13 sublanes x 3 lanes; the kernel runs once on the
    whole tile resident in VMEM, and the result is reshaped back.

    # TODO(synk): if this ever generalizes to large arrays, switch to a tiled
    # BlockSpec grid with a lane-dense last dim (multiple of 128), second-to-
    # last a multiple of 8, tiles >= 512x512 f32 to hit ~85% of HBM roofline,
    # dimension_semantics=("parallel",) on the row axis (2 TCs on v7x), and
    # size tiles against scoped VMEM: ~32 MiB on v6e/v7x (64 MiB physical on
    # v7x, 128 MiB on v6e), ~16 MiB on v5e, raising vmem_limit_bytes if needed.
    """
    orig_shape = a.shape
    flat = a.reshape((1, a.size))  # lane-dense: all 39 elements on the lane axis
    out_flat = pl.pallas_call(
        _add_self_kernel,
        out_shape=jax.ShapeDtypeStruct(flat.shape, flat.dtype),
        in_specs=[pl.BlockSpec(memory_space=pltpu.MemorySpace.VMEM)],
        out_specs=pl.BlockSpec(memory_space=pltpu.MemorySpace.VMEM),
        input_output_aliases={0: 0},
        cost_estimate=pl.CostEstimate(
            flops=39, bytes_accessed=312, transcendentals=0
        ),
    )(flat)
    return out_flat.reshape(orig_shape)


if __name__ == "__main__":
    key = jax.random.PRNGKey(0)
    # Same shape/dtype as the module's example_input: torch.rand([13, 3], float32)
    a = jax.random.uniform(key, (13, 3), dtype=jnp.float32)

    # Compute the reference first (the kernel's output aliases its input buffer).
    expected = a + a

    out = quant_add(a)
    jax.block_until_ready(out)

    assert out.shape == (13, 3) and out.dtype == jnp.float32
    assert jnp.allclose(out, expected, atol=0.0, rtol=0.0)

    print("KERNEL_OK")
</pallas_src>

<mosaic_0001>
module attributes {stable_mosaic.version = 11 : i64} {
  func.func @_add_self_kernel(%arg0: memref<1x39xf32, #tpu.memory_space<vmem>>, %arg1: memref<1x39xf32, #tpu.memory_space<vmem>>) attributes {dimension_semantics = [], scalar_prefetch = 0 : i64, scratch_operands = 0 : i64, tpu.core_type = #tpu.core_type<tc>} {
    %c0 = arith.constant 0 : index
    %c0_0 = arith.constant 0 : index
    %0 = vector.load %arg0[%c0, %c0_0] : memref<1x39xf32, #tpu.memory_space<vmem>>, vector<1x39xf32>
    %1 = arith.addf %0, %0 : vector<1x39xf32>
    %c0_1 = arith.constant 0 : index
    %c0_2 = arith.constant 0 : index
    %2 = vector.load %arg1[%c0_1, %c0_2] : memref<1x39xf32, #tpu.memory_space<vmem>>, vector<1x39xf32>
    tpu.vector_store %arg1[%c0_1, %c0_2], %1 {strides = array<i32>} : memref<1x39xf32, #tpu.memory_space<vmem>>, vector<1x39xf32>,
    return
  }
}

</mosaic_0001>

<llo_original>
// kernel: tpu_custom_call.1
$region0: #{tpu_custom_call.1}
  #allocation0 [shape = 'u32[]', space=smem, size = 0x4, offset = 0x4, fixed_abs, tag = 'smem constant byte address 0x4 - core index']
  #allocation1 [shape = 'u32[144,128]{1,0:T(1,128)}', space=vmem, size = 0x12000, scoped, tag = 'internal scratch']
  %s0 = inlined_call_operand.hbm [shape: f32[1,39], index: 0, kind: input, shape index: {}, may-alias: {0,1}]
  %s1 = inlined_call_operand.hbm [shape: f32[1,39], index: 1, kind: output, shape index: {}, may-alias: {0,1}]
  %s2 = sld [smem:[#allocation0]]
  $region18: #{tpu_custom_call.1} parent=0
    _
  %s4 = ssub.s32 1, %s2
  %s5 = scalar_select 0, %s4, %s2
  $region1: #{tpu_custom_call.1} parent=0
    #allocation2 [shape = 'u8[512]{0}', space=vmem, size = 0x400, scoped, tag = 'input window, operand 0, single buffered']
    #allocation3 [shape = 's32[1]{0}', space=sflag, size = 0x4, scoped, tag = 'scoped memory for tpu_custom_call.1']
    #allocation4 [shape = 's32[1]{0}', space=sflag, size = 0x4, scoped, tag = 'scoped memory for tpu_custom_call.1']
    #allocation5 [shape = 'u8[512]{0}', space=vmem, size = 0x400, scoped, tag = 'output window, operand 0, single buffered']
    %6 = vsyncpa [#allocation3], 0
    %7 = vsyncpa [#allocation4], 0
    // Predicated region
    $region2: #{tpu_custom_call.1} parent=1 // pred_check
      _
    $region3: #{tpu_custom_call.1} parent=1 // pred_check_branch
      %9 = sbr.rel (0) target = $region5
    $region4: #{tpu_custom_call.1} parent=1 // pred_region
      %s11 = ssub.s32 16, 16
      %12 = vsyncadd [#allocation3], %s11
      %s14 = sshll.u32 [#allocation2], 4
      %s15 = int_to_ptr.vmem [resolvable:$true] %s14
      %17 = dma.hbm_to_vmem [thread:$0]  %s0, 16, %s15, [#allocation3]
    $region5: #{tpu_custom_call.1} parent=1 // pred_fallthru
      _
    // Predicated region
    $region6: #{tpu_custom_call.1} parent=1 // pred_check
      _
    $region7: #{tpu_custom_call.1} parent=1 // pred_check_branch
      %19 = sbr.rel (0) target = $region9
    $region8: #{tpu_custom_call.1} parent=1 // pred_region
      %20 = dma.done [#allocation3], 16
    $region9: #{tpu_custom_call.1} parent=1 // pred_fallthru
      _
    %v21 = vld [vmem:[#allocation2] sm:$0x1]
    %v22 = vadd.f32 %v21, %v21
    %vm23 = vcmask 311296
    %24 = vst.msk [vmem:[#allocation5] sm:$0x1] %vm23, %v22
    // Predicated region
    $region10: #{tpu_custom_call.1} parent=1 // pred_check
      _
    $region11: #{tpu_custom_call.1} parent=1 // pred_check_branch
      %26 = sbr.rel (0) target = $region13
    $region12: #{tpu_custom_call.1} parent=1 // pred_region
      %s28 = ssub.s32 16, 16
      %29 = vsyncadd [#allocation4], %s28
      %s31 = sshll.u32 [#allocation5], 4
      %s32 = int_to_ptr.vmem [resolvable:$true] %s31
      %34 = dma.vmem_to_hbm [thread:$0]  %s32, 16, %s1, [#allocation4]
    $region13: #{tpu_custom_call.1} parent=1 // pred_fallthru
      _
    // Predicated region
    $region14: #{tpu_custom_call.1} parent=1 // pred_check
      _
    $region15: #{tpu_custom_call.1} parent=1 // pred_check_branch
      %36 = sbr.rel (0) target = $region17
    $region16: #{tpu_custom_call.1} parent=1 // pred_region
      %37 = dma.done [#allocation4], 16
    $region17: #{tpu_custom_call.1} parent=1 // pred_fallthru
      _
    %38 = vsyncpa [#allocation3], 1
    %39 = vsyncpa [#allocation4], 1

</llo_original>
